<compile_context>
chip_gen: v7x
topology: tpu7x:2x2x1
jax: 0.10.0
libtpu: 0.0.40
codegen_flags: <defaults>
</compile_context>

<pallas_src>
import functools

import jax
import jax.numpy as jnp
from jax.experimental import pallas as pl
from jax.experimental.pallas import tpu as pltpu

_LANE = 128


def _pool_1d(src, src_len, bin_size, mode):
    """Pool a (src_len, N) slab down to (bin_size, N) with the PyTorch formula."""
    stride = src_len // bin_size
    kernel = src_len - (bin_size - 1) * stride
    rows = []
    for j in range(bin_size):  # bins are compile-time ints -> static unroll
        win = src[j * stride: j * stride + kernel, :]  # (kernel, N) lane-dense
        if mode == "max":
            rows.append(jnp.max(win, axis=0, keepdims=True))
        else:  # avg (src already float32)
            rows.append(jnp.mean(win, axis=0, keepdims=True))
    if len(rows) == 1:
        return rows[0]
    return jnp.concatenate(rows, axis=0)  # concat along sublanes, lanes untouched


def _spp_kernel(x_ref, o_ref, *, length, bins, mode):
    """x_ref: (L, TILE_BC), o_ref: (sum(bins), TILE_BC) — B*C on lanes."""
    x = x_ref[...]
    if mode == "avg":
        x = x.astype(jnp.float32)  # f32 accumulation for low-precision inputs

    # Compute unique bins from finest to coarsest; derive coarse bins from finer
    # results when the window partitions line up exactly.
    computed = {}
    for b in sorted(set(bins), reverse=True):
        src, src_len = x, length
        if length % b == 0:
            for f in sorted(computed):  # smallest qualifying finer bin = least work
                if f > b and f % b == 0 and length % f == 0:
                    src, src_len = computed[f], f
                    break
        computed[b] = _pool_1d(src, src_len, b, mode)

    out = jnp.concatenate([computed[b] for b in bins], axis=0)  # (total, TILE_BC)
    o_ref[...] = out.astype(o_ref.dtype)


def spatial_pyramid_pooling(x, pyramid_bins, mode="max"):
    """x: (B, C, L) -> (B, C, sum(pyramid_bins)), matching the PyTorch module."""
    assert x.ndim == 3, "Expect a 3D input: (Batch, Channels, Length)"
    if mode not in ("max", "avg"):
        raise NotImplementedError(
            f"Unknown pooling mode '{mode}', expected 'max' or 'avg'")

    B, C, L = x.shape
    bins = tuple(int(b) for b in pyramid_bins)
    total = sum(bins)
    BC = B * C
    dtype_bytes = jnp.dtype(x.dtype).itemsize

    # Lane-dense layout: B*C on the 128-lane axis (layout plumbing in the wrapper).
    xt = x.reshape(BC, L).T  # (L, BC)

    # Size the lane tile so 2x double-buffered (input + output) blocks stay well
    # under the scoped-VMEM limit on every TPU generation.
    vmem_budget = 16 * 1024 * 1024
    bytes_per_lane = 2 * (L + total) * dtype_bytes
    tile_lanes = (vmem_budget // max(bytes_per_lane, 1)) // _LANE * _LANE
    tile_lanes = max(_LANE, min(2048, tile_lanes))
    if tile_lanes >= BC:
        tile_bc = BC  # single full block (full-array lane dim is always legal)
        grid = (1,)
    else:
        tile_bc = tile_lanes  # multiple of 128; partial last block handled by Pallas
        grid = (pl.cdiv(BC, tile_bc),)

    kernel = functools.partial(_spp_kernel, length=L, bins=bins, mode=mode)

    flops = BC * sum(b * (L - (b - 1) * (L // b)) for b in bins)
    bytes_accessed = BC * (L + total) * dtype_bytes

    out_t = pl.pallas_call(
        kernel,
        out_shape=jax.ShapeDtypeStruct((total, BC), x.dtype),
        grid=grid,
        in_specs=[pl.BlockSpec((L, tile_bc), lambda i: (0, i))],
        out_specs=pl.BlockSpec((total, tile_bc), lambda i: (0, i)),
        compiler_params=pltpu.CompilerParams(
            dimension_semantics=("parallel",),
            vmem_limit_bytes=32 * 1024 * 1024,
        ),
        cost_estimate=pl.CostEstimate(
            flops=flops, transcendentals=0, bytes_accessed=bytes_accessed),
    )(xt)

    return out_t.T.reshape(B, C, total)


def _reference_spp(x, pyramid_bins, mode):
    """Pure-JAX reference matching torch.nn.functional.{max,avg}_pool1d."""
    B, C, L = x.shape
    pooled = []
    for b in pyramid_bins:
        s = L // b
        k = L - (b - 1) * s
        cols = []
        for j in range(b):
            w = x[:, :, j * s: j * s + k]
            cols.append(jnp.max(w, axis=2) if mode == "max" else jnp.mean(w, axis=2))
        pooled.append(jnp.stack(cols, axis=2))
    return jnp.concatenate(pooled, axis=2)


if __name__ == "__main__":
    key = jax.random.PRNGKey(0)
    B, C, L = 2, 4, 16
    pyramid_bins = [1, 2, 4]

    x = jax.random.normal(key, (B, C, L), dtype=jnp.float32)

    for mode in ("max", "avg"):
        out = jax.block_until_ready(spatial_pyramid_pooling(x, pyramid_bins, mode))
        ref = _reference_spp(x, pyramid_bins, mode)
        assert out.shape == (B, C, sum(pyramid_bins)), out.shape
        assert jnp.allclose(out, ref, atol=1e-5), f"mismatch vs reference ({mode})"

    print("KERNEL_OK")
</pallas_src>

<mosaic_0001>
module attributes {stable_mosaic.version = 11 : i64} {
  func.func @_spp_kernel(%arg0: i32, %arg1: memref<16x8xf32, #tpu.memory_space<vmem>>, %arg2: memref<7x8xf32, #tpu.memory_space<vmem>>) attributes {dimension_semantics = [#tpu.dimension_semantics<parallel>], iteration_bounds = array<i64: 1>, scalar_prefetch = 0 : i64, scratch_operands = 0 : i64, tpu.core_type = #tpu.core_type<tc>, window_params = [{transform_indices = @transform_0, window_bounds = array<i64: 16, 8>}, {transform_indices = @transform_1, window_bounds = array<i64: 7, 8>}]} {
    %c0 = arith.constant 0 : index
    %c0_0 = arith.constant 0 : index
    %0 = vector.load %arg1[%c0, %c0_0] : memref<16x8xf32, #tpu.memory_space<vmem>>, vector<16x8xf32>
    %1 = vector.extract_strided_slice %0 {offsets = [0, 0], sizes = [4, 8], strides = [1, 1]} : vector<16x8xf32> to vector<4x8xf32>
    %cst = arith.constant dense<0xFF800000> : vector<8xf32>
    %2 = vector.multi_reduction <maximumf>, %1, %cst [0] : vector<4x8xf32> to vector<8xf32>
    %3 = vector.shape_cast %2 : vector<8xf32> to vector<1x8xf32>
    %4 = vector.extract_strided_slice %0 {offsets = [4, 0], sizes = [4, 8], strides = [1, 1]} : vector<16x8xf32> to vector<4x8xf32>
    %cst_1 = arith.constant dense<0xFF800000> : vector<8xf32>
    %5 = vector.multi_reduction <maximumf>, %4, %cst_1 [0] : vector<4x8xf32> to vector<8xf32>
    %6 = vector.shape_cast %5 : vector<8xf32> to vector<1x8xf32>
    %7 = vector.extract_strided_slice %0 {offsets = [8, 0], sizes = [4, 8], strides = [1, 1]} : vector<16x8xf32> to vector<4x8xf32>
    %cst_2 = arith.constant dense<0xFF800000> : vector<8xf32>
    %8 = vector.multi_reduction <maximumf>, %7, %cst_2 [0] : vector<4x8xf32> to vector<8xf32>
    %9 = vector.shape_cast %8 : vector<8xf32> to vector<1x8xf32>
    %10 = vector.extract_strided_slice %0 {offsets = [12, 0], sizes = [4, 8], strides = [1, 1]} : vector<16x8xf32> to vector<4x8xf32>
    %cst_3 = arith.constant dense<0xFF800000> : vector<8xf32>
    %11 = vector.multi_reduction <maximumf>, %10, %cst_3 [0] : vector<4x8xf32> to vector<8xf32>
    %12 = vector.shape_cast %11 : vector<8xf32> to vector<1x8xf32>
    %13 = tpu.concatenate %3, %6, %9, %12 in 0 : vector<1x8xf32>, vector<1x8xf32>, vector<1x8xf32>, vector<1x8xf32> -> vector<4x8xf32>
    %14 = vector.extract_strided_slice %13 {offsets = [0, 0], sizes = [2, 8], strides = [1, 1]} : vector<4x8xf32> to vector<2x8xf32>
    %cst_4 = arith.constant dense<0xFF800000> : vector<8xf32>
    %15 = vector.multi_reduction <maximumf>, %14, %cst_4 [0] : vector<2x8xf32> to vector<8xf32>
    %16 = vector.shape_cast %15 : vector<8xf32> to vector<1x8xf32>
    %17 = vector.extract_strided_slice %13 {offsets = [2, 0], sizes = [2, 8], strides = [1, 1]} : vector<4x8xf32> to vector<2x8xf32>
    %cst_5 = arith.constant dense<0xFF800000> : vector<8xf32>
    %18 = vector.multi_reduction <maximumf>, %17, %cst_5 [0] : vector<2x8xf32> to vector<8xf32>
    %19 = vector.shape_cast %18 : vector<8xf32> to vector<1x8xf32>
    %20 = tpu.concatenate %16, %19 in 0 : vector<1x8xf32>, vector<1x8xf32> -> vector<2x8xf32>
    %cst_6 = arith.constant dense<0xFF800000> : vector<8xf32>
    %21 = vector.multi_reduction <maximumf>, %20, %cst_6 [0] : vector<2x8xf32> to vector<8xf32>
    %22 = vector.shape_cast %21 : vector<8xf32> to vector<1x8xf32>
    %23 = tpu.concatenate %22, %20, %13 in 0 : vector<1x8xf32>, vector<2x8xf32>, vector<4x8xf32> -> vector<7x8xf32>
    %c0_7 = arith.constant 0 : index
    %c0_8 = arith.constant 0 : index
    %24 = vector.load %arg2[%c0_7, %c0_8] : memref<7x8xf32, #tpu.memory_space<vmem>>, vector<7x8xf32>
    tpu.vector_store %arg2[%c0_7, %c0_8], %23 {strides = array<i32>} : memref<7x8xf32, #tpu.memory_space<vmem>>, vector<7x8xf32>,
    return
  }
  func.func @transform_0(%arg0: i32) -> (i32, i32) {
    %c0_i32 = arith.constant 0 : i32
    %c0_i32_0 = arith.constant 0 : i32
    return %c0_i32, %arg0 : i32, i32
  }
  func.func @transform_1(%arg0: i32) -> (i32, i32) {
    %c0_i32 = arith.constant 0 : i32
    %c0_i32_0 = arith.constant 0 : i32
    return %c0_i32, %arg0 : i32, i32
  }
}

</mosaic_0001>

<llo_original>
// kernel: tpu_custom_call.1
$region0: #{tpu_custom_call.1}
  #allocation0 [shape = 'u32[]', space=smem, size = 0x4, offset = 0x4, fixed_abs, tag = 'smem constant byte address 0x4 - core index']
  #allocation1 [shape = 'u32[144,128]{1,0:T(1,128)}', space=vmem, size = 0x12000, scoped, tag = 'internal scratch']
  %s0 = inlined_call_operand.vmem [shape: f32[16,8], index: 0, kind: input, shape index: {}]
  %s1 = inlined_call_operand.hbm [shape: f32[7,8], index: 1, kind: output, shape index: {}]
  %s2 = sld [smem:[#allocation0]]
  $region14: #{tpu_custom_call.1} parent=0
    _
  %s4 = ssub.s32 1, %s2
  %s5 = scalar_select 0, %s4, %s2
  $region1: #{tpu_custom_call.1} parent=0
    #allocation2 [shape = 'u8[4096]{0}', space=vmem, size = 0x1000, scoped, tag = 'output window, operand 0, single buffered']
    #allocation3 [shape = 's32[1]{0}', space=sflag, size = 0x4, scoped, tag = 'scoped memory for tpu_custom_call.1']
    %6 = vsyncpa [#allocation3], 0
    // Predicated region
    $region2: #{tpu_custom_call.1} parent=1 // pred_check
      _
    $region3: #{tpu_custom_call.1} parent=1 // pred_check_branch
      %8 = sbr.rel (0) target = $region5
    $region4: #{tpu_custom_call.1} parent=1 // pred_region
      _
    $region5: #{tpu_custom_call.1} parent=1 // pred_fallthru
      _
    %v9 = vld [vmem:[%s0] sm:$0xff]
    %v10 = vld [vmem:[%s0 + $0x8] sm:$0xff]
    %vm11 = vcmask 60416
    %v12 = vsel %vm11, %v9, -inf
    %v13 = vrot.slane %v12, 4
    %v14 = vmax.f32 %v12, %v13
    %v15 = vrot.slane %v14, 2
    %v16 = vmax.f32 %v14, %v15
    %v17 = vrot.slane %v16, 1
    %v18 = vmax.f32 %v16, %v17
    %vm19 = vcmask 64516
    %v20 = vsel %vm19, %v9, -inf
    %v21 = vrot.slane %v20, 4
    %v22 = vmax.f32 %v20, %v21
    %v23 = vrot.slane %v22, 2
    %v24 = vmax.f32 %v22, %v23
    %v25 = vrot.slane %v24, 1
    %v26 = vmax.f32 %v24, %v25
    %v27 = vsel %vm11, %v10, -inf
    %v28 = vrot.slane %v27, 4
    %v29 = vmax.f32 %v27, %v28
    %v30 = vrot.slane %v29, 2
    %v31 = vmax.f32 %v29, %v30
    %v32 = vrot.slane %v31, 1
    %v33 = vmax.f32 %v31, %v32
    %v34 = vsel %vm19, %v10, -inf
    %v35 = vrot.slane %v34, 4
    %v36 = vmax.f32 %v34, %v35
    %v37 = vrot.slane %v36, 2
    %v38 = vmax.f32 %v36, %v37
    %v39 = vrot.slane %v38, 1
    %v40 = vmax.f32 %v38, %v39
    %vm41 = vcmask 1040384
    %v42 = vsel %vm41, %v18, %v26
    %vm43 = vcmask 1041408
    %v44 = vsel %vm43, %v42, %v33
    %vm45 = vcmask 1042432
    %v46 = vsel %vm45, %v44, %v40
    %vm47 = vcmask 58368
    %v48 = vsel %vm47, %v46, -inf
    %v49 = vrot.slane %v48, 4
    %v50 = vmax.f32 %v48, %v49
    %v51 = vrot.slane %v50, 2
    %v52 = vmax.f32 %v50, %v51
    %v53 = vrot.slane %v52, 1
    %v54 = vmax.f32 %v52, %v53
    %vm55 = vcmask 60418
    %v56 = vsel %vm55, %v46, -inf
    %v57 = vrot.slane %v56, 4
    %v58 = vmax.f32 %v56, %v57
    %v59 = vrot.slane %v58, 2
    %v60 = vmax.f32 %v58, %v59
    %v61 = vrot.slane %v60, 1
    %v62 = vmax.f32 %v60, %v61
    %v63 = vsel %vm41, %v54, %v62
    %v64 = vsel %vm47, %v63, -inf
    %v65 = vrot.slane %v64, 4
    %v66 = vmax.f32 %v64, %v65
    %v67 = vrot.slane %v66, 2
    %v68 = vmax.f32 %v66, %v67
    %v69 = vrot.slane %v68, 1
    %v70 = vmax.f32 %v68, %v69
    %v72 = vrot.slane %v63, 7
    %v75 = vrot.slane %v46, 5
    %v77 = vsel %vm41, %v70, %v72
    %v78 = vsel %vm45, %v77, %v75
    %vm79 = vcmask 63488
    %80 = vst.msk [vmem:[#allocation2] sm:$0x7f] %vm79, %v78
    // Predicated region
    $region6: #{tpu_custom_call.1} parent=1 // pred_check
      _
    $region7: #{tpu_custom_call.1} parent=1 // pred_check_branch
      %82 = sbr.rel (0) target = $region9
    $region8: #{tpu_custom_call.1} parent=1 // pred_region
      %s84 = ssub.s32 128, 128
      %85 = vsyncadd [#allocation3], %s84
      %s87 = sshll.u32 [#allocation2], 4
      %s88 = int_to_ptr.vmem [resolvable:$true] %s87
      %90 = dma.vmem_to_hbm [thread:$0]  %s88, 128, %s1, [#allocation3]
    $region9: #{tpu_custom_call.1} parent=1 // pred_fallthru
      _
    // Predicated region
    $region10: #{tpu_custom_call.1} parent=1 // pred_check
      _
    $region11: #{tpu_custom_call.1} parent=1 // pred_check_branch
      %92 = sbr.rel (0) target = $region13
    $region12: #{tpu_custom_call.1} parent=1 // pred_region
      %93 = dma.done [#allocation3], 128
    $region13: #{tpu_custom_call.1} parent=1 // pred_fallthru
      _
    %94 = vsyncpa [#allocation3], 1

</llo_original>
